<compile_context>
chip_gen: v7x
topology: tpu7x:2x2x1
jax: 0.10.0
libtpu: 0.0.40
codegen_flags: <defaults>
</compile_context>

<pallas_src>
import functools

import jax
import jax.numpy as jnp
from jax.experimental import pallas as pl
from jax.experimental.pallas import tpu as pltpu


def _round_up(x, m):
    return ((x + m - 1) // m) * m


def _make_ffn_kernel(residual):
    def kernel(x_ref, w1_ref, b1_ref, w2_ref, b2_ref, o_ref):
        x = x_ref[...]                                   # (TM, C_in), input dtype
        x_mx = x.astype(jnp.bfloat16)                    # bf16 MXU operand (no-op if bf16)
        h = jnp.dot(x_mx, w1_ref[...],                   # (TM, C_in), f32 acc
                    preferred_element_type=jnp.float32)
        h = jnp.maximum(h + b1_ref[...], 0.0)            # bias + ReLU in f32
        h = h.astype(jnp.bfloat16)                       # bf16 intermediate for 2nd matmul
        y = jnp.dot(h, w2_ref[...],                      # (TM, C_out), f32 acc
                    preferred_element_type=jnp.float32)
        y = y + b2_ref[...]
        if residual:
            y = y + x.astype(jnp.float32)                # residual in f32
        o_ref[...] = y.astype(o_ref.dtype)
    return kernel


@functools.partial(jax.jit, static_argnames=("tile_m",))
def pointwise_feed_forward(inputs, w1, b1, w2, b2, *, tile_m=1024):
    """inputs: (B, L, C_in); w1: (C_in, C_in); w2: (C_in, C_out); b*: (C,)."""
    B, L, C_in = inputs.shape
    C_out = w2.shape[1]
    residual = (C_out == C_in)

    itemsize = jnp.dtype(inputs.dtype).itemsize
    sublane_mult = {4: 8, 2: 16, 1: 32}.get(itemsize, 8)  # (sublane, lane) min tile rows

    # ---- token-axis tiling: no wrapper pad, ragged last block handled by Pallas ----
    M = B * L
    if M <= sublane_mult:
        TM = sublane_mult
    elif M < 2 * tile_m:
        # Split into >= 2 tiles so both v7x TensorCores get work.
        TM = min(tile_m, _round_up(pl.cdiv(M, 2), sublane_mult))
    else:
        TM = tile_m

    def _footprint(tm):
        # double-buffered x/out tiles + double-buffered resident weights/biases
        # + generous f32-intermediate headroom.
        return (2 * tm * C_in * itemsize
                + 2 * tm * C_out * itemsize
                + 2 * (C_in * C_in + C_in * C_out) * 2
                + 2 * (C_in + C_out) * 4
                + 4 * tm * max(C_in, C_out) * 4)

    # Cap TM so the footprint stays comfortably inside v7x's 64 MiB per-TC VMEM.
    while TM > sublane_mult and _footprint(TM) > 48 * 1024 * 1024:
        TM = max(sublane_mult, _round_up(TM // 2, sublane_mult))

    n_tiles = pl.cdiv(M, TM)
    vmem_limit = int(min(48 * 1024 * 1024,
                         max(32 * 1024 * 1024, int(_footprint(TM) * 1.25))))

    x2d = inputs.reshape(M, C_in)                                   # no copy, no pad
    w1b = w1.astype(jnp.bfloat16)                                   # tiny, VMEM-resident
    w2b = w2.astype(jnp.bfloat16)
    b1f = b1.astype(jnp.float32).reshape(1, C_in)
    b2f = b2.astype(jnp.float32).reshape(1, C_out)

    flops = 2 * M * C_in * (C_in + C_out)
    bytes_accessed = (M * C_in * itemsize
                      + (C_in * C_in + C_in * C_out) * 2
                      + (C_in + C_out) * 4
                      + M * C_out * itemsize)

    out2d = pl.pallas_call(
        _make_ffn_kernel(residual),
        out_shape=jax.ShapeDtypeStruct((M, C_out), inputs.dtype),
        grid=(n_tiles,),
        in_specs=[
            pl.BlockSpec((TM, C_in), lambda i: (i, 0)),     # x tile (pipelined)
            pl.BlockSpec((C_in, C_in), lambda i: (0, 0)),   # w1 (resident)
            pl.BlockSpec((1, C_in), lambda i: (0, 0)),      # b1 (resident)
            pl.BlockSpec((C_in, C_out), lambda i: (0, 0)),  # w2 (resident)
            pl.BlockSpec((1, C_out), lambda i: (0, 0)),     # b2 (resident)
        ],
        out_specs=pl.BlockSpec((TM, C_out), lambda i: (i, 0)),
        compiler_params=pltpu.CompilerParams(
            dimension_semantics=("parallel",),
            vmem_limit_bytes=vmem_limit,
        ),
        cost_estimate=pl.CostEstimate(
            flops=flops, transcendentals=0, bytes_accessed=bytes_accessed),
    )(x2d, w1b, b1f, w2b, b2f)

    return out2d.reshape(B, L, C_out)


def init_params(key, input_size, output_size, dtype=jnp.float32):
    """Conv1d(k=1) weights stored as (in, out) matmul matrices (PyTorch-style init)."""
    k1, k2, k3, k4 = jax.random.split(key, 4)
    bound = 1.0 / (input_size ** 0.5)
    w1 = jax.random.uniform(k1, (input_size, input_size), dtype, -bound, bound)
    b1 = jax.random.uniform(k2, (input_size,), dtype, -bound, bound)
    w2 = jax.random.uniform(k3, (input_size, output_size), dtype, -bound, bound)
    b2 = jax.random.uniform(k4, (output_size,), dtype, -bound, bound)
    return w1, b1, w2, b2


def _reference(x, w1, b1, w2, b2):
    h = jnp.maximum(x @ w1 + b1, 0.0)
    y = h @ w2 + b2
    if w2.shape[1] == x.shape[-1]:
        y = y + x
    return y


if __name__ == "__main__":
    key = jax.random.PRNGKey(0)

    # Residual path (C_out == C_in), SASRec-like small shapes.
    B, L, C_in, C_out = 2, 8, 32, 32
    kx, kp, kp2 = jax.random.split(key, 3)
    x = jax.random.normal(kx, (B, L, C_in), jnp.float32)
    w1, b1, w2, b2 = init_params(kp, C_in, C_out)

    out = pointwise_feed_forward(x, w1, b1, w2, b2)
    out = jax.block_until_ready(out)
    ref = _reference(x, w1, b1, w2, b2)
    assert out.shape == (B, L, C_out)
    # bf16 MXU operands with f32 accumulation -> loose tolerance vs f32 reference.
    assert jnp.allclose(out, ref, atol=2e-2, rtol=2e-2), float(jnp.max(jnp.abs(out - ref)))

    # Non-residual path (C_out != C_in).
    C_out2 = 48
    w1b, b1b, w2b, b2b = init_params(kp2, C_in, C_out2)
    out2 = pointwise_feed_forward(x, w1b, b1b, w2b, b2b)
    out2 = jax.block_until_ready(out2)
    ref2 = _reference(x, w1b, b1b, w2b, b2b)
    assert out2.shape == (B, L, C_out2)
    assert jnp.allclose(out2, ref2, atol=2e-2, rtol=2e-2)

    print("KERNEL_OK")
</pallas_src>

<mosaic_0001>
module attributes {stable_mosaic.version = 11 : i64} {
  func.func @kernel(%arg0: i32, %arg1: memref<8x32xf32, #tpu.memory_space<vmem>>, %arg2: memref<32x32xbf16, #tpu.memory_space<vmem>>, %arg3: memref<1x32xf32, #tpu.memory_space<vmem>>, %arg4: memref<32x32xbf16, #tpu.memory_space<vmem>>, %arg5: memref<1x32xf32, #tpu.memory_space<vmem>>, %arg6: memref<8x32xf32, #tpu.memory_space<vmem>>) attributes {dimension_semantics = [#tpu.dimension_semantics<parallel>], iteration_bounds = array<i64: 2>, scalar_prefetch = 0 : i64, scratch_operands = 0 : i64, tpu.core_type = #tpu.core_type<tc>, window_params = [{transform_indices = @transform_0, window_bounds = array<i64: 8, 32>}, {pipeline_mode = #tpu.pipeline_mode<synchronous>, transform_indices = @transform_1, window_bounds = array<i64: 32, 32>}, {pipeline_mode = #tpu.pipeline_mode<synchronous>, transform_indices = @transform_2, window_bounds = array<i64: 1, 32>}, {pipeline_mode = #tpu.pipeline_mode<synchronous>, transform_indices = @transform_3, window_bounds = array<i64: 32, 32>}, {pipeline_mode = #tpu.pipeline_mode<synchronous>, transform_indices = @transform_4, window_bounds = array<i64: 1, 32>}, {transform_indices = @transform_5, window_bounds = array<i64: 8, 32>}]} {
    %c0 = arith.constant 0 : index
    %c0_0 = arith.constant 0 : index
    %0 = vector.load %arg1[%c0, %c0_0] : memref<8x32xf32, #tpu.memory_space<vmem>>, vector<8x32xf32>
    %1 = arith.truncf %0 : vector<8x32xf32> to vector<8x32xbf16>
    %c0_1 = arith.constant 0 : index
    %c0_2 = arith.constant 0 : index
    %2 = vector.load %arg2[%c0_1, %c0_2] : memref<32x32xbf16, #tpu.memory_space<vmem>>, vector<32x32xbf16>
    %cst = arith.constant dense<0.000000e+00> : vector<8x32xf32>
    %3 = tpu.matmul %1, %2, %cst {dimension_numbers = #tpu.dot_dimension_numbers<[1], [0], [0], [1], [0, 0, 1, 1], [], []>} : vector<8x32xbf16>, vector<32x32xbf16>, vector<8x32xf32> -> vector<8x32xf32>
    %c0_3 = arith.constant 0 : index
    %c0_4 = arith.constant 0 : index
    %4 = vector.load %arg3[%c0_3, %c0_4] : memref<1x32xf32, #tpu.memory_space<vmem>>, vector<1x32xf32>
    %5 = vector.broadcast %4 : vector<1x32xf32> to vector<8x32xf32>
    %6 = arith.addf %3, %5 : vector<8x32xf32>
    %cst_5 = arith.constant 0.000000e+00 : f32
    %7 = vector.broadcast %cst_5 : f32 to vector<8x32xf32>
    %8 = arith.maximumf %6, %7 : vector<8x32xf32>
    %9 = arith.truncf %8 : vector<8x32xf32> to vector<8x32xbf16>
    %c0_6 = arith.constant 0 : index
    %c0_7 = arith.constant 0 : index
    %10 = vector.load %arg4[%c0_6, %c0_7] : memref<32x32xbf16, #tpu.memory_space<vmem>>, vector<32x32xbf16>
    %cst_8 = arith.constant dense<0.000000e+00> : vector<8x32xf32>
    %11 = tpu.matmul %9, %10, %cst_8 {dimension_numbers = #tpu.dot_dimension_numbers<[1], [0], [0], [1], [0, 0, 1, 1], [], []>} : vector<8x32xbf16>, vector<32x32xbf16>, vector<8x32xf32> -> vector<8x32xf32>
    %c0_9 = arith.constant 0 : index
    %c0_10 = arith.constant 0 : index
    %12 = vector.load %arg5[%c0_9, %c0_10] : memref<1x32xf32, #tpu.memory_space<vmem>>, vector<1x32xf32>
    %13 = vector.broadcast %12 : vector<1x32xf32> to vector<8x32xf32>
    %14 = arith.addf %11, %13 : vector<8x32xf32>
    %15 = arith.addf %14, %0 : vector<8x32xf32>
    %c0_11 = arith.constant 0 : index
    %c0_12 = arith.constant 0 : index
    %16 = vector.load %arg6[%c0_11, %c0_12] : memref<8x32xf32, #tpu.memory_space<vmem>>, vector<8x32xf32>
    tpu.vector_store %arg6[%c0_11, %c0_12], %15 {strides = array<i32>} : memref<8x32xf32, #tpu.memory_space<vmem>>, vector<8x32xf32>,
    return
  }
  func.func @transform_0(%arg0: i32) -> (i32, i32) {
    %c0_i32 = arith.constant 0 : i32
    %c0_i32_0 = arith.constant 0 : i32
    return %arg0, %c0_i32 : i32, i32
  }
  func.func @transform_1(%arg0: i32) -> (i32, i32) {
    %c0_i32 = arith.constant 0 : i32
    %c0_i32_0 = arith.constant 0 : i32
    %c0_i32_1 = arith.constant 0 : i32
    return %c0_i32, %c0_i32_0 : i32, i32
  }
  func.func @transform_2(%arg0: i32) -> (i32, i32) {
    %c0_i32 = arith.constant 0 : i32
    %c0_i32_0 = arith.constant 0 : i32
    %c0_i32_1 = arith.constant 0 : i32
    return %c0_i32, %c0_i32_0 : i32, i32
  }
  func.func @transform_3(%arg0: i32) -> (i32, i32) {
    %c0_i32 = arith.constant 0 : i32
    %c0_i32_0 = arith.constant 0 : i32
    %c0_i32_1 = arith.constant 0 : i32
    return %c0_i32, %c0_i32_0 : i32, i32
  }
  func.func @transform_4(%arg0: i32) -> (i32, i32) {
    %c0_i32 = arith.constant 0 : i32
    %c0_i32_0 = arith.constant 0 : i32
    %c0_i32_1 = arith.constant 0 : i32
    return %c0_i32, %c0_i32_0 : i32, i32
  }
  func.func @transform_5(%arg0: i32) -> (i32, i32) {
    %c0_i32 = arith.constant 0 : i32
    %c0_i32_0 = arith.constant 0 : i32
    return %arg0, %c0_i32 : i32, i32
  }
}

</mosaic_0001>

<llo_original>
// kernel: pointwise_feed_forward.1
$region0: #{pointwise_feed_forward.1}
  #allocation0 [shape = 'u32[]', space=smem, size = 0x4, offset = 0x4, fixed_abs, tag = 'smem constant byte address 0x4 - core index']
  #allocation1 [shape = 'u32[144,128]{1,0:T(1,128)}', space=vmem, size = 0x12000, scoped, tag = 'internal scratch']
  %s0 = inlined_call_operand.vmem [shape: f32[16,32], index: 0, kind: input, shape index: {}]
  %s1 = inlined_call_operand.vmem [shape: bf16[32,32], index: 1, kind: input, shape index: {}]
  %s2 = inlined_call_operand.vmem [shape: f32[1,32], index: 2, kind: input, shape index: {}]
  %s3 = inlined_call_operand.vmem [shape: bf16[32,32], index: 3, kind: input, shape index: {}]
  %s4 = inlined_call_operand.vmem [shape: f32[1,32], index: 4, kind: input, shape index: {}]
  %s5 = inlined_call_operand.hbm [shape: f32[16,32], index: 5, kind: output, shape index: {}]
  %s6 = sld [smem:[#allocation0]]
  $region53: #{pointwise_feed_forward.1} parent=0
    _
  %s8 = ssub.s32 1, %s6
  %s9 = scalar_select 0, %s8, %s6
  $region1: #{pointwise_feed_forward.1} parent=0
    #allocation2 [shape = 'u8[8192]{0}', space=vmem, size = 0x2000, scoped, tag = 'output window, operand 0']
    #allocation3 [shape = 's32[2]{0}', space=sflag, size = 0x8, scoped, tag = 'scoped memory for pointwise_feed_forward.1']
    %10 = vsyncpa [#allocation3], 0
    %s11 = scalar_lea.sflag [#allocation3], 1
    %12 = vsyncpa %s11, 0
    loop: start=0, step=1, limit=4
    $region2: #{pointwise_feed_forward.1} parent=1 // loop_pre_header
      _
    $region3: #{pointwise_feed_forward.1} parent=1 // loop_header
      %s14 = sphi 0, %s18
      %p15 = scmp.ge.s32.totalorder %s14, 4
      %s24 = sphi 0, %s26
      %s27 = sphi 0, %s24
      %s28 = sphi 0, %s27
      %s44 = sphi 0, %s28
      %s48 = sphi 0, %s48
      %s50 = sphi 0, %s48
      %s51 = sphi 0, %s50
      %s65 = sphi 0, %s51
      %s69 = sphi 0, %s69
      %s71 = sphi 0, %s69
      %s72 = sphi 0, %s71
      %s86 = sphi 0, %s72
      %s90 = sphi 0, %s90
      %s92 = sphi 0, %s90
      %s93 = sphi 0, %s92
      %s107 = sphi 0, %s93
      %s111 = sphi 0, %s111
      %s113 = sphi 0, %s111
      %s114 = sphi 0, %s113
      %s128 = sphi 0, %s114
      %s134 = sphi 0, %s136
      %s137 = sphi 0, %s134
      %s138 = sphi 0, %s137
      %s154 = sphi 0, %s138
    $region4: #{pointwise_feed_forward.1} parent=1 // loop_header_branch
      %17 = sbr.rel (%p15) target = $region8
    $region5: #{pointwise_feed_forward.1} parent=1 // loop_body
      %s19 = ssub.s32 %s14, 1
      %s20 = ssub.s32 %s14, 2
      %s21 = sadd.s32 %s14, 1
      %s22 = ssub.s32 %s14, %s21
      %p23 = scmp.eq.s32.totalorder %s22, 0
      %s25 = sadd.s32 %s24, 1
      %s26 = scalar_select %p23, %s24, %s25
      %p29 = pneg %p23
      %p30 = scmp.eq.s32.totalorder %s14, 1
      %p31 = por %p29, %p30
      %p32 = scmp.ne.s32.totalorder %s24, %s27
      %p33 = scmp.eq.s32.totalorder %s14, 0
      %p34 = por %p32, %p33
      %p35 = scmp.ne.s32.totalorder %s24, %s27
      %p36 = scmp.eq.s32.totalorder %s19, 1
      %p37 = por %p35, %p36
      %p38 = scmp.ne.s32.totalorder %s27, %s28
      %p39 = scmp.eq.s32.totalorder %s19, 0
      %p40 = por %p38, %p39
      %p41 = scmp.ne.s32.totalorder %s27, %s28
      %p42 = scmp.eq.s32.totalorder %s20, 1
      %p43 = por %p41, %p42
      %p45 = scmp.ne.s32.totalorder %s28, %s44
      %p46 = scmp.eq.s32.totalorder %s20, 0
      %p47 = por %p45, %p46
      %s49 = sadd.s32 %s48, 1
      %p52 = scmp.eq.s32.totalorder %s14, 1
      %p53 = scmp.ne.s32.totalorder %s48, %s50
      %p54 = scmp.eq.s32.totalorder %s14, 0
      %p55 = por %p53, %p54
      %p56 = scmp.ne.s32.totalorder %s48, %s50
      %p57 = scmp.eq.s32.totalorder %s19, 1
      %p58 = por %p56, %p57
      %p59 = scmp.ne.s32.totalorder %s50, %s51
      %p60 = scmp.eq.s32.totalorder %s19, 0
      %p61 = por %p59, %p60
      %p62 = scmp.ne.s32.totalorder %s50, %s51
      %p63 = scmp.eq.s32.totalorder %s20, 1
      %p64 = por %p62, %p63
      %p66 = scmp.ne.s32.totalorder %s51, %s65
      %p67 = scmp.eq.s32.totalorder %s20, 0
      %p68 = por %p66, %p67
      %s70 = sadd.s32 %s69, 1
      %p73 = scmp.eq.s32.totalorder %s14, 1
      %p74 = scmp.ne.s32.totalorder %s69, %s71
      %p75 = scmp.eq.s32.totalorder %s14, 0
      %p76 = por %p74, %p75
      %p77 = scmp.ne.s32.totalorder %s69, %s71
      %p78 = scmp.eq.s32.totalorder %s19, 1
      %p79 = por %p77, %p78
      %p80 = scmp.ne.s32.totalorder %s71, %s72
      %p81 = scmp.eq.s32.totalorder %s19, 0
      %p82 = por %p80, %p81
      %p83 = scmp.ne.s32.totalorder %s71, %s72
      %p84 = scmp.eq.s32.totalorder %s20, 1
      %p85 = por %p83, %p84
      %p87 = scmp.ne.s32.totalorder %s72, %s86
      %p88 = scmp.eq.s32.totalorder %s20, 0
      %p89 = por %p87, %p88
      %s91 = sadd.s32 %s90, 1
      %p94 = scmp.eq.s32.totalorder %s14, 1
      %p95 = scmp.ne.s32.totalorder %s90, %s92
      %p96 = scmp.eq.s32.totalorder %s14, 0
      %p97 = por %p95, %p96
      %p98 = scmp.ne.s32.totalorder %s90, %s92
      %p99 = scmp.eq.s32.totalorder %s19, 1
      %p100 = por %p98, %p99
      %p101 = scmp.ne.s32.totalorder %s92, %s93
      %p102 = scmp.eq.s32.totalorder %s19, 0
      %p103 = por %p101, %p102
      %p104 = scmp.ne.s32.totalorder %s92, %s93
      %p105 = scmp.eq.s32.totalorder %s20, 1
      %p106 = por %p104, %p105
      %p108 = scmp.ne.s32.totalorder %s93, %s107
      %p109 = scmp.eq.s32.totalorder %s20, 0
      %p110 = por %p108, %p109
      %s112 = sadd.s32 %s111, 1
      %p115 = scmp.eq.s32.totalorder %s14, 1
      %p116 = scmp.ne.s32.totalorder %s111, %s113
      %p117 = scmp.eq.s32.totalorder %s14, 0
      %p118 = por %p116, %p117
      %p119 = scmp.ne.s32.totalorder %s111, %s113
      %p120 = scmp.eq.s32.totalorder %s19, 1
      %p121 = por %p119, %p120
      %p122 = scmp.ne.s32.totalorder %s113, %s114
      %p123 = scmp.eq.s32.totalorder %s19, 0
      %p124 = por %p122, %p123
      %p125 = scmp.ne.s32.totalorder %s113, %s114
      %p126 = scmp.eq.s32.totalorder %s20, 1
      %p127 = por %p125, %p126
      %p129 = scmp.ne.s32.totalorder %s114, %s128
      %p130 = scmp.eq.s32.totalorder %s20, 0
      %p131 = por %p129, %p130
      %s132 = ssub.s32 %s14, %s21
      %p133 = scmp.eq.s32.totalorder %s132, 0
      %s135 = sadd.s32 %s134, 1
      %s136 = scalar_select %p133, %s134, %s135
      %p139 = pneg %p133
      %p140 = scmp.eq.s32.totalorder %s14, 1
      %p141 = por %p139, %p140
      %p142 = scmp.ne.s32.totalorder %s134, %s137
      %p143 = scmp.eq.s32.totalorder %s14, 0
      %p144 = por %p142, %p143
      %p145 = scmp.ne.s32.totalorder %s134, %s137
      %p146 = scmp.eq.s32.totalorder %s19, 1
      %p147 = por %p145, %p146
      %p148 = scmp.ne.s32.totalorder %s137, %s138
      %p149 = scmp.eq.s32.totalorder %s19, 0
      %p150 = por %p148, %p149
      %p151 = scmp.ne.s32.totalorder %s137, %s138
      %p152 = scmp.eq.s32.totalorder %s20, 1
      %p153 = por %p151, %p152
      %p155 = scmp.ne.s32.totalorder %s138, %s154
      %p156 = scmp.eq.s32.totalorder %s20, 0
      %p157 = por %p155, %p156
      %p158 = scmp.le.s32.totalorder 1, %s14
      %p159 = scmp.lt.s32.totalorder %s14, 3
      %p160 = pnand %p158, %p159
      %p161 = pneg %p160
      // Predicated region
      $region9: #{pointwise_feed_forward.1} parent=5 // pred_check
        _
      $region10: #{pointwise_feed_forward.1} parent=5 // pred_check_branch
        %163 = sbr.rel (%p160) target = $region12
      $region11: #{pointwise_feed_forward.1} parent=5 // pred_region
        %s164 = ssub.s32 %s14, 1
        // Predicated region
        $region13: #{pointwise_feed_forward.1} parent=11 // pred_check
          %p165 = pneg %p61
        $region14: #{pointwise_feed_forward.1} parent=11 // pred_check_branch
          %167 = sbr.rel (%p165) target = $region16
        $region15: #{pointwise_feed_forward.1} parent=11 // pred_region
          _
        $region16: #{pointwise_feed_forward.1} parent=11 // pred_fallthru
          _
        // Predicated region
        $region17: #{pointwise_feed_forward.1} parent=11 // pred_check
          %p168 = pneg %p82
        $region18: #{pointwise_feed_forward.1} parent=11 // pred_check_branch
          %170 = sbr.rel (%p168) target = $region20
        $region19: #{pointwise_feed_forward.1} parent=11 // pred_region
          _
        $region20: #{pointwise_feed_forward.1} parent=11 // pred_fallthru
          _
        // Predicated region
        $region21: #{pointwise_feed_forward.1} parent=11 // pred_check
          %p171 = pneg %p103
        $region22: #{pointwise_feed_forward.1} parent=11 // pred_check_branch
          %173 = sbr.rel (%p171) target = $region24
        $region23: #{pointwise_feed_forward.1} parent=11 // pred_region
          _
        $region24: #{pointwise_feed_forward.1} parent=11 // pred_fallthru
          _
        // Predicated region
        $region25: #{pointwise_feed_forward.1} parent=11 // pred_check
          %p174 = pneg %p124
        $region26: #{pointwise_feed_forward.1} parent=11 // pred_check_branch
          %176 = sbr.rel (%p174) target = $region28
        $region27: #{pointwise_feed_forward.1} parent=11 // pred_region
          _
        $region28: #{pointwise_feed_forward.1} parent=11 // pred_fallthru
          _
      $region12: #{pointwise_feed_forward.1} parent=5 // pred_fallthru
        _
      %p177 = scmp.lt.s32.totalorder %s14, 2
      // Predicated region
      $region29: #{pointwise_feed_forward.1} parent=5 // pred_check
        %p178 = pneg %p177
      $region30: #{pointwise_feed_forward.1} parent=5 // pred_check_branch
        %180 = sbr.rel (%p178) target = $region32
      $region31: #{pointwise_feed_forward.1} parent=5 // pred_region
        // Predicated region
        $region33: #{pointwise_feed_forward.1} parent=31 // pred_check
          %p181 = pneg %p34
        $region34: #{pointwise_feed_forward.1} parent=31 // pred_check_branch
          %183 = sbr.rel (%p181) target = $region36
        $region35: #{pointwise_feed_forward.1} parent=31 // pred_region
          %p184 = scmp.lt.s32.totalorder %s14, 1
          %s185 = scalar_select %p184, %s14, 1
          %s186 = smul.addr %s185, 8
          %s187 = scalar_lea.vmem %s0, %s186
        $region36: #{pointwise_feed_forward.1} parent=31 // pred_fallthru
          _
      $region32: #{pointwise_feed_forward.1} parent=5 // pred_fallthru
        _
      %p188 = scmp.le.s32.totalorder 1, %s14
      %p189 = scmp.lt.s32.totalorder %s14, 3
      %p190 = pnand %p188, %p189
      %p191 = pneg %p190
      // Predicated region
      $region37: #{pointwise_feed_forward.1} parent=5 // pred_check
        _
      $region38: #{pointwise_feed_forward.1} parent=5 // pred_check_branch
        %193 = sbr.rel (%p190) target = $region40
      $region39: #{pointwise_feed_forward.1} parent=5 // pred_region
        %s194 = ssub.s32 %s14, 1
        %p195 = scmp.lt.s32.totalorder %s19, 1
        %s196 = scalar_select %p195, %s19, 1
        %s197 = smul.addr %s196, 8
        %s198 = scalar_lea.vmem %s0, %s197
        %p199 = pneg %p40
        %p200 = pneg %p37
        %p201 = pneg %p61
        %p202 = pneg %p58
        %p203 = pneg %p82
        %p204 = pneg %p79
        %p205 = pneg %p103
        %p206 = pneg %p100
        %p207 = pneg %p124
        %p208 = pneg %p121
        %p209 = pneg %p150
        %p210 = pneg %p147
        %s211 = sand.u32 %s137, 1
        %s212 = scalar_lea.sflag [#allocation3], %s211
        %s213 = sand.u32 %s137, 1
        %s214 = smul.addr %s213, 8
        %s215 = scalar_lea.vmem [#allocation2], %s214
        %p216 = scmp.lt.s32.totalorder %s19, 1
        %s217 = scalar_select %p216, %s19, 1
        %s218 = smul.addr %s217, 8
        %s219 = scalar_lea.vmem %s0, %s218
        %v221 = vld [vmem:[%s219] sm:$0xff]
        %v222 = vpack.c.bf16 %v221, %v221
        %v223 = vld [vmem:[%s1] sm:$0xf]
        %v224 = vld [vmem:[%s1 + $0x4] sm:$0xf]
        %v225 = vld [vmem:[%s1 + $0x8] sm:$0xf]
        %v226 = vld [vmem:[%s1 + $0xc] sm:$0xf]
        %v227 = vld [vmem:[%s2] sm:$0x1]
        %v229 = vlaneseq
        %v230 = vshrl.u32 %v229, 7
        %v231 = vsub.s32 0, %v230
        %v232 = vrot.slane %v227, %v231
        %v238 = vunpack.c.l.b16 %v223
        %v239 = vunpack.c.l.b16 %v224
        %v240 = vunpack.c.l.b16 %v225
        %v241 = vunpack.c.l.b16 %v226
        %v242 = vpack.c.b16 %v239, %v238
        %v243 = vpack.c.b16 %v241, %v240
        %vm246 = vcmask 261120
        %v248 = vsel %vm246, %v222, 0
        %250 = vmatprep.subr.bf16.mxu0 0
        %251 = vmatpush1.bf16.msra.mxu0 %v242
        %252 = vmatprep.subr.bf16.mxu0 0
        %253 = vmatpush1.bf16.msra.mxu0 %v243
        %254 = vmatprep.subr.bf16.mxu0 0
        %255 = vmatpush1.bf16.msra.mxu0 0
        %256 = vmatprep.subr.bf16.mxu0 0
        %257 = vmatpush1.bf16.msra.mxu0 0
        %258 = vmatprep.subr.bf16.mxu0 0
        %259 = vmatpush1.bf16.msra.mxu0 0
        %260 = vmatprep.subr.bf16.mxu0 0
        %261 = vmatpush1.bf16.msra.mxu0 0
        %262 = vmatprep.subr.bf16.mxu0 0
        %263 = vmatpush1.bf16.msra.mxu0 0
        %264 = vmatprep.subr.bf16.mxu0 0
        %265 = vmatpush1.bf16.msra.mxu0 0
        %266 = vmatprep.subr.bf16.mxu0 0
        %267 = vmatpush1.bf16.msra.mxu0 0
        %268 = vmatprep.subr.bf16.mxu0 0
        %269 = vmatpush1.bf16.msra.mxu0 0
        %270 = vmatprep.subr.bf16.mxu0 0
        %271 = vmatpush1.bf16.msra.mxu0 0
        %272 = vmatprep.subr.bf16.mxu0 0
        %273 = vmatpush1.bf16.msra.mxu0 0
        %274 = vmatprep.subr.bf16.mxu0 0
        %275 = vmatpush1.bf16.msra.mxu0 0
        %276 = vmatprep.subr.bf16.mxu0 0
        %277 = vmatpush1.bf16.msra.mxu0 0
        %278 = vmatprep.subr.bf16.mxu0 0
        %279 = vmatpush1.bf16.msra.mxu0 0
        %280 = vmatprep.subr.bf16.mxu0 0
        %281 = vmatpush1.bf16.msra.mxu0 0
        %282 = vmatprep.mubr.bf16.mxu0 0
        %283 = vmatmul.mubr.bf16.gmra.mrb[0].mxu0 %v248
        %v284 = vpop.f32.mrb[0].mxu0
        %v285 = vadd.f32 %v232, %v284
        %v286 = vpop.f32.mrb[0].mxu0
        %v287 = vpop.f32.mrb[0].mxu0
        %v288 = vpop.f32.mrb[0].mxu0
        %289 = vdwg.mxu0
        %v290 = vmax.f32 %v285, 0.0
        %v291 = vpack.c.bf16 %v290, %v290
        %v292 = vld [vmem:[%s3] sm:$0xf]
        %v293 = vld [vmem:[%s3 + $0x4] sm:$0xf]
        %v294 = vld [vmem:[%s3 + $0x8] sm:$0xf]
        %v295 = vld [vmem:[%s3 + $0xc] sm:$0xf]
        %v296 = vld [vmem:[%s4] sm:$0x1]
        %v298 = vlaneseq
        %v299 = vshrl.u32 %v298, 7
        %v300 = vsub.s32 0, %v299
        %v301 = vrot.slane %v296, %v300
        %v307 = vunpack.c.l.b16 %v292
        %v308 = vunpack.c.l.b16 %v293
        %v309 = vunpack.c.l.b16 %v294
        %v310 = vunpack.c.l.b16 %v295
        %v311 = vpack.c.b16 %v308, %v307
        %v312 = vpack.c.b16 %v310, %v309
        %v316 = vsel %vm246, %v291, 0
        %318 = vmatprep.subr.bf16.mxu0 0
        %319 = vmatpush1.bf16.msra.mxu0 %v311
        %320 = vmatprep.subr.bf16.mxu0 0
        %321 = vmatpush1.bf16.msra.mxu0 %v312
        %322 = vmatprep.subr.bf16.mxu0 0
        %323 = vmatpush1.bf16.msra.mxu0 0
        %324 = vmatprep.subr.bf16.mxu0 0
        %325 = vmatpush1.bf16.msra.mxu0 0
        %326 = vmatprep.subr.bf16.mxu0 0
        %327 = vmatpush1.bf16.msra.mxu0 0
        %328 = vmatprep.subr.bf16.mxu0 0
        %329 = vmatpush1.bf16.msra.mxu0 0
        %330 = vmatprep.subr.bf16.mxu0 0
        %331 = vmatpush1.bf16.msra.mxu0 0
        %332 = vmatprep.subr.bf16.mxu0 0
        %333 = vmatpush1.bf16.msra.mxu0 0
        %334 = vmatprep.subr.bf16.mxu0 0
        %335 = vmatpush1.bf16.msra.mxu0 0
        %336 = vmatprep.subr.bf16.mxu0 0
        %337 = vmatpush1.bf16.msra.mxu0 0
        %338 = vmatprep.subr.bf16.mxu0 0
        %339 = vmatpush1.bf16.msra.mxu0 0
        %340 = vmatprep.subr.bf16.mxu0 0
        %341 = vmatpush1.bf16.msra.mxu0 0
        %342 = vmatprep.subr.bf16.mxu0 0
        %343 = vmatpush1.bf16.msra.mxu0 0
        %344 = vmatprep.subr.bf16.mxu0 0
        %345 = vmatpush1.bf16.msra.mxu0 0
        %346 = vmatprep.subr.bf16.mxu0 0
        %347 = vmatpush1.bf16.msra.mxu0 0
        %348 = vmatprep.subr.bf16.mxu0 0
        %349 = vmatpush1.bf16.msra.mxu0 0
        %350 = vmatprep.mubr.bf16.mxu0 0
        %351 = vmatmul.mubr.bf16.gmra.mrb[0].mxu0 %v316
        %v352 = vpop.f32.mrb[0].mxu0
        %v353 = vadd.f32 %v301, %v352
        %v354 = vpop.f32.mrb[0].mxu0
        %v355 = vpop.f32.mrb[0].mxu0
        %v356 = vpop.f32.mrb[0].mxu0
        %357 = vdwg.mxu0
        %v358 = vadd.f32 %v353, %v221
        %359 = vst.msk [vmem:[%s215] sm:$0xff] %vm246, %v358
        %s360 = sand.u32 %s137, 1
        %s361 = scalar_lea.sflag [#allocation3], %s360
        %s362 = sand.u32 %s137, 1
        %s363 = smul.addr %s362, 8
        %s364 = scalar_lea.vmem [#allocation2], %s363
        // Predicated region
        $region41: #{pointwise_feed_forward.1} parent=39 // pred_check
          %p365 = pneg %p147
        $region42: #{pointwise_feed_forward.1} parent=39 // pred_check_branch
          %367 = sbr.rel (%p365) target = $region44
        $region43: #{pointwise_feed_forward.1} parent=39 // pred_region
          %s369 = ssub.s32 128, 128
          %370 = vsyncadd %s361, %s369
          %s371 = smul.addr %s19, 128
          %s372 = scalar_lea.hbm %s5, %s371
          %s374 = sshll.u32 %s364, 4
          %s375 = int_to_ptr.vmem [resolvable:$true] %s374
          %377 = dma.vmem_to_hbm [thread:$0]  %s375, 128, %s372, %s361
        $region44: #{pointwise_feed_forward.1} parent=39 // pred_fallthru
          _
      $region40: #{pointwise_feed_forward.1} parent=5 // pred_fallthru
        _
      %p378 = scmp.le.s32.totalorder 2, %s14
      // Predicated region
      $region45: #{pointwise_feed_forward.1} parent=5 // pred_check
        %p379 = pneg %p378
      $region46: #{pointwise_feed_forward.1} parent=5 // pred_check_branch
        %381 = sbr.rel (%p379) target = $region48
      $region47: #{pointwise_feed_forward.1} parent=5 // pred_region
        %s382 = ssub.s32 %s14, 2
        // Predicated region
        $region49: #{pointwise_feed_forward.1} parent=47 // pred_check
          %p383 = pneg %p153
        $region50: #{pointwise_feed_forward.1} parent=47 // pred_check_branch
          %385 = sbr.rel (%p383) target = $region52
        $region51: #{pointwise_feed_forward.1} parent=47 // pred_region
          %s386 = sand.u32 %s138, 1
          %s387 = scalar_lea.sflag [#allocation3], %s386
          %s388 = sand.u32 %s138, 1
          %s389 = smul.addr %s388, 8
          %s390 = scalar_lea.vmem [#allocation2], %s389
          %391 = dma.done %s387, 128
        $region52: #{pointwise_feed_forward.1} parent=47 // pred_fallthru
          _
      $region48: #{pointwise_feed_forward.1} parent=5 // pred_fallthru
        _
    $region6: #{pointwise_feed_forward.1} parent=1 // loop_footer
      %s18 = sadd.s32 1, %s14
    $region7: #{pointwise_feed_forward.1} parent=1 // loop_footer_branch
      %13 = sbr.rel target = $region3
    $region8: #{pointwise_feed_forward.1} parent=1 // loop_exit
      _
    %392 = vsyncpa [#allocation3], 1
    %s393 = scalar_lea.sflag [#allocation3], 1
    %394 = vsyncpa %s393, 1

</llo_original>
